<compile_context>
chip_gen: v5e
topology: v5e:2x2
jax: 0.10.0
libtpu: 0.0.40
codegen_flags: <defaults>
</compile_context>

<pallas_src>
import jax
import jax.numpy as jnp
from jax.experimental import pallas as pl
from jax.experimental.pallas import tpu as pltpu


def _round_up(a: int, b: int) -> int:
    return ((a + b - 1) // b) * b


def _linear_kernel(x_ref, w_ref, o_ref, acc_ref):
    """One (tm, tn) output tile; K-reduction accumulated across grid axis 2.

    x_ref:   (tm, tk)  row tile of node features
    w_ref:   (tk, tn)  tile of the (already transposed) weight
    o_ref:   (tm, tn)  output tile
    acc_ref: (tm, tn)  f32 VMEM accumulator (persists across the K axis)
    """
    @pl.when(pl.program_id(2) == 0)
    def _():
        acc_ref[...] = jnp.zeros_like(acc_ref)

    acc_ref[...] += jnp.dot(
        x_ref[...], w_ref[...], preferred_element_type=jnp.float32
    )

    @pl.when(pl.program_id(2) == pl.num_programs(2) - 1)
    def _():
        o_ref[...] = acc_ref[...].astype(o_ref.dtype)


def mlp_update(x, edge_index, weight):
    """Pallas implementation of MLPUpdate.forward.

    Args:
      x:          [N, in_channels] float node features.
      edge_index: [2, E] int32 (passed through unchanged).
      weight:     [out_channels, in_channels] float (PyTorch Linear layout).
    Returns:
      (x @ weight.T, edge_index)
    """
    m, k = x.shape
    n, k_w = weight.shape
    assert k_w == k, "weight in_channels must match x feature dim"

    # ---- tile selection -----------------------------------------------------
    # Big problems: 512-wide tiles (MXU-friendly, small VMEM footprint).
    # Small problems: one block spanning the whole (padded) dim -> 1 grid step.
    tm = 512 if m > 512 else _round_up(m, 8)        # sublane-aligned rows
    tk = min(512, _round_up(k, 128))                # lane-aligned K
    tn = min(512, _round_up(n, 128))                # lane-dense output cols

    grid_m = pl.cdiv(m, tm)
    grid_n = pl.cdiv(n, tn)
    grid_k = pl.cdiv(k, tk)

    m_pad = grid_m * tm
    n_pad = grid_n * tn
    k_pad = grid_k * tk

    # ---- layout prep (zero padding is inert for the K reduction) -----------
    xp = x
    if (m_pad, k_pad) != (m, k):
        xp = jnp.pad(x, ((0, m_pad - m), (0, k_pad - k)))

    # Transpose once to [K, N] so the kernel is a plain [tm,tk] @ [tk,tn]
    # matmul (no per-tile transpose on the MXU path), then pad lane-dense.
    wt = weight.T
    if (k_pad, n_pad) != (k, n):
        wt = jnp.pad(wt, ((0, k_pad - k), (0, n_pad - n)))

    flops = 2 * m_pad * n_pad * k_pad
    bytes_accessed = (
        xp.size * xp.dtype.itemsize
        + wt.size * wt.dtype.itemsize
        + m_pad * n_pad * x.dtype.itemsize
    )

    out_padded = pl.pallas_call(
        _linear_kernel,
        out_shape=jax.ShapeDtypeStruct((m_pad, n_pad), x.dtype),
        grid_spec=pltpu.PrefetchScalarGridSpec(
            num_scalar_prefetch=0,
            grid=(grid_m, grid_n, grid_k),
            in_specs=[
                pl.BlockSpec((tm, tk), lambda i, j, kk: (i, kk)),  # x tile
                pl.BlockSpec((tk, tn), lambda i, j, kk: (kk, j)),  # w tile
            ],
            out_specs=pl.BlockSpec((tm, tn), lambda i, j, kk: (i, j)),
            scratch_shapes=[pltpu.VMEM((tm, tn), jnp.float32)],
        ),
        compiler_params=pltpu.CompilerParams(
            # M/N tiles are independent (megacore-shardable); K carries the
            # accumulator and must stay "arbitrary" (and last).
            dimension_semantics=("parallel", "parallel", "arbitrary"),
            vmem_limit_bytes=48 * 1024 * 1024,
        ),
        cost_estimate=pl.CostEstimate(
            flops=flops, transcendentals=0, bytes_accessed=bytes_accessed
        ),
    )(xp, wt)

    out = out_padded
    if (m_pad, n_pad) != (m, n):
        out = out_padded[:m, :n]

    return out, edge_index


if __name__ == "__main__":
    key = jax.random.PRNGKey(0)
    k_x, k_w, k_e = jax.random.split(key, 3)

    num_nodes = 16
    in_channels = 32
    out_channels = 16
    num_edges = 24

    x = jax.random.normal(k_x, (num_nodes, in_channels), dtype=jnp.float32)
    # Deterministic weight init (stand-in for PyTorch's kaiming-uniform).
    weight = (
        jax.random.uniform(k_w, (out_channels, in_channels), dtype=jnp.float32)
        - 0.5
    ) * (2.0 / jnp.sqrt(in_channels))
    edge_index = jax.random.randint(
        k_e, (2, num_edges), 0, num_nodes, dtype=jnp.int32
    )

    out, edges_out = mlp_update(x, edge_index, weight)
    jax.block_until_ready(out)
    jax.block_until_ready(edges_out)

    # Correctness check against plain JAX reference.
    ref = x @ weight.T
    assert out.shape == ref.shape
    assert jnp.allclose(out, ref, atol=1e-5, rtol=1e-5)
    assert (edges_out == edge_index).all()

    print("KERNEL_OK")
</pallas_src>

<mosaic_0001>
module attributes {stable_mosaic.version = 11 : i64} {
  func.func @_linear_kernel(%arg0: i32, %arg1: i32, %arg2: i32, %arg3: memref<16x128xf32, #tpu.memory_space<vmem>>, %arg4: memref<128x128xf32, #tpu.memory_space<vmem>>, %arg5: memref<16x128xf32, #tpu.memory_space<vmem>>, %arg6: memref<16x128xf32, #tpu.memory_space<vmem>>) attributes {dimension_semantics = [#tpu.dimension_semantics<parallel>, #tpu.dimension_semantics<parallel>, #tpu.dimension_semantics<arbitrary>], iteration_bounds = array<i64: 1, 1, 1>, scalar_prefetch = 0 : i64, scratch_operands = 1 : i64, tpu.core_type = #tpu.core_type<tc>, window_params = [{transform_indices = @transform_0, window_bounds = array<i64: 16, 128>}, {transform_indices = @transform_1, window_bounds = array<i64: 128, 128>}, {transform_indices = @transform_2, window_bounds = array<i64: 16, 128>}]} {
    %c0_i32 = arith.constant 0 : i32
    %0 = arith.cmpi eq, %arg2, %c0_i32 : i32
    %1 = arith.extui %0 : i1 to i32
    %c0_i32_0 = arith.constant 0 : i32
    %2 = arith.cmpi ne, %1, %c0_i32_0 : i32
    scf.if %2 {
      %cst_10 = arith.constant 0.000000e+00 : f32
      %12 = vector.broadcast %cst_10 : f32 to vector<16x128xf32>
      %c0_11 = arith.constant 0 : index
      %c0_12 = arith.constant 0 : index
      %13 = vector.load %arg6[%c0_11, %c0_12] : memref<16x128xf32, #tpu.memory_space<vmem>>, vector<16x128xf32>
      tpu.vector_store %arg6[%c0_11, %c0_12], %12 {strides = array<i32>} : memref<16x128xf32, #tpu.memory_space<vmem>>, vector<16x128xf32>,
    } else {
    }
    %c0 = arith.constant 0 : index
    %c0_1 = arith.constant 0 : index
    %3 = vector.load %arg6[%c0, %c0_1] : memref<16x128xf32, #tpu.memory_space<vmem>>, vector<16x128xf32>
    %c0_2 = arith.constant 0 : index
    %c0_3 = arith.constant 0 : index
    %4 = vector.load %arg3[%c0_2, %c0_3] : memref<16x128xf32, #tpu.memory_space<vmem>>, vector<16x128xf32>
    %c0_4 = arith.constant 0 : index
    %c0_5 = arith.constant 0 : index
    %5 = vector.load %arg4[%c0_4, %c0_5] : memref<128x128xf32, #tpu.memory_space<vmem>>, vector<128x128xf32>
    %cst = arith.constant dense<0.000000e+00> : vector<16x128xf32>
    %6 = tpu.matmul %4, %5, %cst {dimension_numbers = #tpu.dot_dimension_numbers<[1], [0], [0], [1], [0, 0, 1, 1], [], []>} : vector<16x128xf32>, vector<128x128xf32>, vector<16x128xf32> -> vector<16x128xf32>
    %7 = arith.addf %3, %6 : vector<16x128xf32>
    %c0_6 = arith.constant 0 : index
    %c0_7 = arith.constant 0 : index
    %8 = vector.load %arg6[%c0_6, %c0_7] : memref<16x128xf32, #tpu.memory_space<vmem>>, vector<16x128xf32>
    tpu.vector_store %arg6[%c0_6, %c0_7], %7 {strides = array<i32>} : memref<16x128xf32, #tpu.memory_space<vmem>>, vector<16x128xf32>,
    %c0_i32_8 = arith.constant 0 : i32
    %9 = arith.cmpi eq, %arg2, %c0_i32_8 : i32
    %10 = arith.extui %9 : i1 to i32
    %c0_i32_9 = arith.constant 0 : i32
    %11 = arith.cmpi ne, %10, %c0_i32_9 : i32
    scf.if %11 {
      %c0_10 = arith.constant 0 : index
      %c0_11 = arith.constant 0 : index
      %12 = vector.load %arg6[%c0_10, %c0_11] : memref<16x128xf32, #tpu.memory_space<vmem>>, vector<16x128xf32>
      %c0_12 = arith.constant 0 : index
      %c0_13 = arith.constant 0 : index
      %13 = vector.load %arg5[%c0_12, %c0_13] : memref<16x128xf32, #tpu.memory_space<vmem>>, vector<16x128xf32>
      tpu.vector_store %arg5[%c0_12, %c0_13], %12 {strides = array<i32>} : memref<16x128xf32, #tpu.memory_space<vmem>>, vector<16x128xf32>,
    } else {
    }
    return
  }
  func.func @transform_0(%arg0: i32, %arg1: i32, %arg2: i32) -> (i32, i32) {
    %c0_i32 = arith.constant 0 : i32
    return %arg0, %arg2 : i32, i32
  }
  func.func @transform_1(%arg0: i32, %arg1: i32, %arg2: i32) -> (i32, i32) {
    %c0_i32 = arith.constant 0 : i32
    return %arg2, %arg1 : i32, i32
  }
  func.func @transform_2(%arg0: i32, %arg1: i32, %arg2: i32) -> (i32, i32) {
    %c0_i32 = arith.constant 0 : i32
    return %arg0, %arg1 : i32, i32
  }
}

</mosaic_0001>

<llo_original>
// kernel: tpu_custom_call.1
$region0: #{tpu_custom_call.1}
  #allocation0 [shape = 'u32[]', space=smem, size = 0x4, offset = 0x4, fixed_abs, tag = 'smem constant byte address 0x4 - core index']
  #allocation1 [shape = 'u32[72,128]{1,0:T(1,128)}', space=vmem, size = 0x9000, scoped, tag = 'internal scratch']
  #allocation2 [shape = 'f32[16,128]{1,0:T(8,128)}', space=vmem, size = 0x2000, scoped, tag = 'scratch operand']
  %s0 = inlined_call_operand.hbm [shape: f32[16,128], index: 0, kind: input, shape index: {}]
  %s1 = inlined_call_operand.hbm [shape: f32[128,128], index: 1, kind: input, shape index: {}]
  %s2 = inlined_call_operand.hbm [shape: f32[16,128], index: 2, kind: output, shape index: {}]
  %s3 = sld [smem:[#allocation0]]
  $region34: #{tpu_custom_call.1} parent=0
    _
  %s5 = ssub.s32 1, %s3
  %s6 = scalar_select 0, %s5, %s3
  $region1: #{tpu_custom_call.1} parent=0
    #allocation3 [shape = 'u8[8192]{0}', space=vmem, size = 0x2000, scoped, tag = 'input window, operand 0, single buffered']
    #allocation4 [shape = 's32[1]{0}', space=sflag, size = 0x4, scoped, tag = 'scoped memory for tpu_custom_call.1']
    #allocation5 [shape = 's32[1]{0}', space=sflag, size = 0x4, scoped, tag = 'scoped memory for tpu_custom_call.1']
    #allocation6 [shape = 'u8[65536]{0}', space=vmem, size = 0x10000, scoped, tag = 'input window, operand 1, single buffered']
    #allocation7 [shape = 's32[1]{0}', space=sflag, size = 0x4, scoped, tag = 'scoped memory for tpu_custom_call.1']
    #allocation8 [shape = 'u8[8192]{0}', space=vmem, size = 0x2000, scoped, tag = 'output window, operand 0, single buffered']
    %7 = vsyncpa [#allocation4], 0
    %8 = vsyncpa [#allocation7], 0
    %9 = vsyncpa [#allocation5], 0
    // Predicated region
    $region2: #{tpu_custom_call.1} parent=1 // pred_check
      _
    $region3: #{tpu_custom_call.1} parent=1 // pred_check_branch
      %11 = sbr.rel (0) target = $region5
    $region4: #{tpu_custom_call.1} parent=1 // pred_region
      %13 = vsyncadd [#allocation4], 0
      %s14 = sshll.u32 %s0, 4
      %s15 = int_to_ptr.hbm [resolvable:$true] %s14
      %s16 = sshll.u32 [#allocation3], 4
      %s17 = int_to_ptr.vmem [resolvable:$true] %s16
      %22 = dma.hbm_to_vmem [thread:$0]  %s15, 256, %s17, [#allocation4], 128, 128, 8
    $region5: #{tpu_custom_call.1} parent=1 // pred_fallthru
      _
    // Predicated region
    $region6: #{tpu_custom_call.1} parent=1 // pred_check
      _
    $region7: #{tpu_custom_call.1} parent=1 // pred_check_branch
      %24 = sbr.rel (0) target = $region9
    $region8: #{tpu_custom_call.1} parent=1 // pred_region
      %26 = vsyncadd [#allocation7], 0
      %s27 = sshll.u32 %s1, 4
      %s28 = int_to_ptr.hbm [resolvable:$true] %s27
      %s29 = sshll.u32 [#allocation6], 4
      %s30 = int_to_ptr.vmem [resolvable:$true] %s29
      %35 = dma.hbm_to_vmem [thread:$0]  %s28, 2048, %s30, [#allocation7], 128, 128, 8
    $region9: #{tpu_custom_call.1} parent=1 // pred_fallthru
      _
    // Predicated region
    $region10: #{tpu_custom_call.1} parent=1 // pred_check
      _
    $region11: #{tpu_custom_call.1} parent=1 // pred_check_branch
      %37 = sbr.rel (0) target = $region13
    $region12: #{tpu_custom_call.1} parent=1 // pred_region
      %39 = dma.done [#allocation4], 256
    $region13: #{tpu_custom_call.1} parent=1 // pred_fallthru
      _
    // Predicated region
    $region14: #{tpu_custom_call.1} parent=1 // pred_check
      _
    $region15: #{tpu_custom_call.1} parent=1 // pred_check_branch
      %41 = sbr.rel (0) target = $region17
    $region16: #{tpu_custom_call.1} parent=1 // pred_region
      %43 = dma.done [#allocation7], 2048
    $region17: #{tpu_custom_call.1} parent=1 // pred_fallthru
      _
    %p44 = scmp.eq.s32.totalorder 0, 0
    // Predicated region
    $region18: #{tpu_custom_call.1} parent=1 // pred_check
      %p45 = pneg %p44
    $region19: #{tpu_custom_call.1} parent=1 // pred_check_branch
      %47 = sbr.rel (%p45) target = $region21
    $region20: #{tpu_custom_call.1} parent=1 // pred_region
      %48 = vst [vmem:[#allocation2] sm:$0xff] 0.0
      %49 = vst [vmem:[#allocation2 + $0x8] sm:$0xff] 0.0
    $region21: #{tpu_custom_call.1} parent=1 // pred_fallthru
      _
    %v50 = vld [vmem:[#allocation2] sm:$0xff]
    %v51 = vld [vmem:[#allocation2 + $0x8] sm:$0xff]
    %v52 = vld [vmem:[#allocation3] sm:$0xff]
    %v53 = vld [vmem:[#allocation3 + $0x8] sm:$0xff]
    %v54 = vld [vmem:[#allocation6] sm:$0xff]
    %v55 = vld [vmem:[#allocation6 + $0x8] sm:$0xff]
    %v56 = vld [vmem:[#allocation6 + $0x10] sm:$0xff]
    %v57 = vld [vmem:[#allocation6 + $0x18] sm:$0xff]
    %v58 = vld [vmem:[#allocation6 + $0x20] sm:$0xff]
    %v59 = vld [vmem:[#allocation6 + $0x28] sm:$0xff]
    %v60 = vld [vmem:[#allocation6 + $0x30] sm:$0xff]
    %v61 = vld [vmem:[#allocation6 + $0x38] sm:$0xff]
    %v62 = vld [vmem:[#allocation6 + $0x40] sm:$0xff]
    %v63 = vld [vmem:[#allocation6 + $0x48] sm:$0xff]
    %v64 = vld [vmem:[#allocation6 + $0x50] sm:$0xff]
    %v65 = vld [vmem:[#allocation6 + $0x58] sm:$0xff]
    %v66 = vld [vmem:[#allocation6 + $0x60] sm:$0xff]
    %v67 = vld [vmem:[#allocation6 + $0x68] sm:$0xff]
    %v68 = vld [vmem:[#allocation6 + $0x70] sm:$0xff]
    %v69 = vld [vmem:[#allocation6 + $0x78] sm:$0xff]
    %70 = vmatpush.msra.mxu0 %v69
    %71 = vmatpush.msra.mxu0 %v68
    %72 = vmatpush.msra.mxu0 %v67
    %73 = vmatpush.msra.mxu0 %v66
    %74 = vmatpush.msra.mxu0 %v65
    %75 = vmatpush.msra.mxu0 %v64
    %76 = vmatpush.msra.mxu0 %v63
    %77 = vmatpush.msra.mxu0 %v62
    %78 = vmatpush.msra.mxu0 %v61
    %79 = vmatpush.msra.mxu0 %v60
    %80 = vmatpush.msra.mxu0 %v59
    %81 = vmatpush.msra.mxu0 %v58
    %82 = vmatpush.msra.mxu0 %v57
    %83 = vmatpush.msra.mxu0 %v56
    %84 = vmatpush.msra.mxu0 %v55
    %85 = vmatpush.msra.mxu0 %v54
    %86 = vmatmul.f32.gmra.mxu0 %v52
    %v87 = vpop.f32.mrf.mxu0
    %v88 = vadd.f32 0.0, %v87
    %89 = vmatmul.f32.gmra.mxu0 %v53
    %v90 = vpop.f32.mrf.mxu0
    %v91 = vadd.f32 0.0, %v90
    %92 = vdwg.mxu0
    %v93 = vadd.f32 %v50, %v88
    %v94 = vadd.f32 %v51, %v91
    %95 = vst [vmem:[#allocation2] sm:$0xff] %v93
    %96 = vst [vmem:[#allocation2 + $0x8] sm:$0xff] %v94
    // Predicated region
    $region22: #{tpu_custom_call.1} parent=1 // pred_check
      %p97 = pneg %p44
    $region23: #{tpu_custom_call.1} parent=1 // pred_check_branch
      %99 = sbr.rel (%p97) target = $region25
    $region24: #{tpu_custom_call.1} parent=1 // pred_region
      %v100 = vld [vmem:[#allocation2] sm:$0xff]
      %v101 = vld [vmem:[#allocation2 + $0x8] sm:$0xff]
      %102 = vst [vmem:[#allocation8] sm:$0xff] %v100
      %103 = vst [vmem:[#allocation8 + $0x8] sm:$0xff] %v101
    $region25: #{tpu_custom_call.1} parent=1 // pred_fallthru
      _
    // Predicated region
    $region26: #{tpu_custom_call.1} parent=1 // pred_check
      _
    $region27: #{tpu_custom_call.1} parent=1 // pred_check_branch
      %105 = sbr.rel (0) target = $region29
    $region28: #{tpu_custom_call.1} parent=1 // pred_region
      %107 = vsyncadd [#allocation5], 0
      %s108 = sshll.u32 [#allocation8], 4
      %s109 = int_to_ptr.vmem [resolvable:$true] %s108
      %s110 = sshll.u32 %s2, 4
      %s111 = int_to_ptr.hbm [resolvable:$true] %s110
      %116 = dma.vmem_to_hbm [thread:$0]  %s109, 256, %s111, [#allocation5], 128, 128, 8
    $region29: #{tpu_custom_call.1} parent=1 // pred_fallthru
      _
    // Predicated region
    $region30: #{tpu_custom_call.1} parent=1 // pred_check
      _
    $region31: #{tpu_custom_call.1} parent=1 // pred_check_branch
      %118 = sbr.rel (0) target = $region33
    $region32: #{tpu_custom_call.1} parent=1 // pred_region
      %120 = dma.done [#allocation5], 256
    $region33: #{tpu_custom_call.1} parent=1 // pred_fallthru
      _
    %121 = vsyncpa [#allocation4], 1
    %122 = vsyncpa [#allocation7], 1
    %123 = vsyncpa [#allocation5], 1

</llo_original>
